<compile_context>
chip_gen: v5e
topology: v5e:2x2
jax: 0.10.0
libtpu: 0.0.40
codegen_flags: <defaults>
</compile_context>

<pallas_src>
import functools

import numpy as np

import jax
import jax.numpy as jnp
from jax.experimental import pallas as pl
from jax.experimental.pallas import tpu as pltpu


_LANE = 128        # pad hidden/output feature dims to multiples of the lane width
_BM_GRAN = 16      # batch-tile granularity (bf16 sublane packing; multiple of f32's 8)
_BM_MAX = 2048     # batch-tile cap (double-buffered f32 (2048,128) out tiles ~ 2 MiB)
_SINGLE_BUFFER_WEIGHT_BYTES = 4 << 20   # above this, single-buffer resident weights


def _round_up(x, m):
    return ((x + m - 1) // m) * m


def _choose_bm(batch_rows):
    """Batch-tile rows: as large as reasonable (per-grid-step overhead ~0.35us
    dominates the tiny per-tile MXU work here), but >=2 tiles when possible so
    both v7x TensorCores get work, and a multiple of 16 for clean bf16 packing."""
    if batch_rows <= _BM_GRAN:
        return _BM_GRAN
    half = _round_up((batch_rows + 1) // 2, _BM_GRAN)
    return min(_BM_MAX, half)


@functools.lru_cache(maxsize=1)
def _gen_aware_vmem_cap():
    """Generation-aware scoped-VMEM cap: ~half of physical VMEM.
    -> ~32 MiB on v7x (64 MiB/TC), ~64 MiB on v5e/v6e (128 MiB)."""
    try:
        phys = int(pltpu.get_tpu_info().vmem_capacity_bytes)
    except Exception:           # API drift / no device info: fall back v7x-safe
        phys = 64 << 20
    return max(16 << 20, phys // 2)


def _pad_params(params, mxu_dtype):
    """Zero-pad every (W, b) so all feature dims are multiples of 128.

    Correctness of the zero padding relies on (a) padded bias lanes being
    exactly zero and (b) the activation satisfying f(0) == 0 (Swish does), so
    padded lanes stay exactly zero through every layer and never leak into
    valid columns.  Called ONCE at module construction (hot-path hoist)."""
    padded = []
    for w, b in params:
        d_i, d_o = int(w.shape[0]), int(w.shape[1])
        p_i, p_o = _round_up(d_i, _LANE), _round_up(d_o, _LANE)
        wp = jnp.zeros((p_i, p_o), mxu_dtype).at[:d_i, :d_o].set(
            w.astype(mxu_dtype))
        bp = jnp.zeros((1, p_o), jnp.float32).at[0, :d_o].set(
            b.astype(jnp.float32))
        padded.append((wp, bp))
    return tuple(padded)


# ---------------------------------------------------------------------------
# Fused MLP kernel: the entire network runs inside ONE pallas_call.
# ---------------------------------------------------------------------------
def _fused_mlp_kernel(*refs, n_linear, mxu_dtype, d_in, pad_input):
    """refs = (x_ref, w0, b0, ..., w_{n-1}, b_{n-1}, o_ref[, xpad_scratch]).

    x_ref : (bm, d_in)       io dtype  (true feature width; no HBM lane pad)
    w_l   : (P_l, P_{l+1})   mxu_dtype VMEM-resident (constant block index)
    b_l   : (1, P_{l+1})     f32
    o_ref : (bm, Pout)       f32
    xpad  : (bm, Pin)        io dtype  scratch: zero-extend x to 128 lanes

    Matmuls run on the MXU in `mxu_dtype` with f32 accumulation; bias add and
    Swish stay in f32 (v5e's VPU/EUP have no bf16 path).  Padded lanes stay
    exactly zero through every layer (Swish(0)==0, padded bias lanes are 0).
    """
    x_ref = refs[0]
    o_ref = refs[1 + 2 * n_linear]

    if pad_input:
        xpad_ref = refs[2 + 2 * n_linear]
        # Re-zero every iteration (cheap VMEM store) so correctness does not
        # depend on which TensorCore ran which grid step under "parallel".
        xpad_ref[...] = jnp.zeros_like(xpad_ref)
        xpad_ref[:, :d_in] = x_ref[...]
        h = xpad_ref[...]                                   # (bm, Pin) io dtype
    else:
        h = x_ref[...]

    for l in range(n_linear):
        w_ref = refs[1 + 2 * l]
        b_ref = refs[2 + 2 * l]
        h = jnp.dot(h, w_ref[...],
                    preferred_element_type=jnp.float32)     # MXU, f32 accumulate
        h = h + b_ref[...]                                  # f32 bias add
        if l != n_linear - 1:
            h = (h * jax.nn.sigmoid(h)).astype(mxu_dtype)   # Swish (beta=1), f32
    o_ref[...] = h.astype(o_ref.dtype)


@functools.partial(
    jax.jit, static_argnames=("d_out", "use_bf16_mxu", "vmem_cap_bytes"))
def fused_mlp_forward(x, padded_params, *, d_out, use_bf16_mxu=True,
                      vmem_cap_bytes=32 << 20):
    """Run the whole Swish-MLP in a single fused Pallas kernel.

    x             : (N, d_in) float (any precision; cast once to the I/O dtype)
    padded_params : tuple of lane-padded (W, b) from _pad_params (cached)
    returns       : (N, d_out) float32
    """
    N, d_in = x.shape
    n_linear = len(padded_params)
    io_dtype = jnp.bfloat16 if use_bf16_mxu else jnp.float32
    io_itemsize = jnp.dtype(io_dtype).itemsize
    p_in = int(padded_params[0][0].shape[0])
    p_out = int(padded_params[-1][0].shape[1])
    pad_input = (p_in != d_in)

    bm = _choose_bm(N)
    n_pad = _round_up(N, bm)

    # Single cast to the I/O dtype (halves the x HBM stream when bf16).  x is
    # kept at its TRUE feature width: no 32x lane-padding inflation in HBM.
    x_io = x.astype(io_dtype)
    if n_pad != N:
        x_io = jnp.concatenate(
            [x_io, jnp.zeros((n_pad - N, d_in), io_dtype)], axis=0)

    grid = (n_pad // bm,)

    weight_bytes = sum(
        int(w.shape[0]) * int(w.shape[1]) * w.dtype.itemsize
        + int(b.shape[0]) * int(b.shape[1]) * b.dtype.itemsize
        for w, b in padded_params)
    # Constant block index => no re-fetch, so for large resident weight stacks
    # drop the second pipeline buffer (matters for v7x's 64 MiB VMEM).  Tiny
    # stacks keep the default (double-buffering them is harmless).
    weight_pipeline = (pl.Buffered(1)
                       if weight_bytes > _SINGLE_BUFFER_WEIGHT_BYTES else None)

    in_specs = [pl.BlockSpec((bm, d_in), lambda i: (i, 0))]
    flat_inputs = [x_io]
    for wp, bp in padded_params:
        if weight_pipeline is None:
            in_specs.append(pl.BlockSpec(wp.shape, lambda i: (0, 0)))
            in_specs.append(pl.BlockSpec(bp.shape, lambda i: (0, 0)))
        else:
            in_specs.append(pl.BlockSpec(wp.shape, lambda i: (0, 0),
                                         pipeline_mode=weight_pipeline))
            in_specs.append(pl.BlockSpec(bp.shape, lambda i: (0, 0),
                                         pipeline_mode=weight_pipeline))
        flat_inputs += [wp, bp]
    # NOTE: biases stay (1, p_out); folding them into W (ones-column trick) or
    # replicating to 8 sublanes is a minor follow-up once DMA/overhead wins land.

    out_specs = pl.BlockSpec((bm, p_out), lambda i: (i, 0))
    scratch_shapes = [pltpu.VMEM((bm, p_in), io_dtype)] if pad_input else []

    # Explicit, generation-aware VMEM budget (cap = half of physical VMEM).
    tile_bytes = (2 * bm * d_in * io_itemsize        # double-buffered x tiles
                  + 2 * bm * p_out * 4               # double-buffered out tiles
                  + bm * p_in * io_itemsize)         # lane-pad scratch
    wmult = 2 if weight_pipeline is None else 1
    vmem_limit = int(min(max(2 * (wmult * weight_bytes + tile_bytes), 16 << 20),
                         vmem_cap_bytes))

    # Advisory cost so XLA schedules surrounding ops around the custom call.
    flops = 2 * n_pad * sum(int(w.shape[0]) * int(w.shape[1])
                            for w, _ in padded_params)
    transcendentals = n_pad * sum(int(w.shape[1])
                                  for w, _ in padded_params[:-1])
    bytes_accessed = (n_pad * d_in * io_itemsize + n_pad * p_out * 4
                      + weight_bytes)
    cost = pl.CostEstimate(flops=flops, transcendentals=transcendentals,
                           bytes_accessed=bytes_accessed)

    out = pl.pallas_call(
        functools.partial(_fused_mlp_kernel, n_linear=n_linear,
                          mxu_dtype=io_dtype, d_in=d_in, pad_input=pad_input),
        out_shape=jax.ShapeDtypeStruct((n_pad, p_out), jnp.float32),
        grid=grid,
        in_specs=in_specs,
        out_specs=out_specs,
        scratch_shapes=scratch_shapes,
        compiler_params=pltpu.CompilerParams(
            dimension_semantics=("parallel",),
            vmem_limit_bytes=vmem_limit),
        cost_estimate=cost,
    )(*flat_inputs)

    # Trim batch padding + padded output lanes; this slice fuses under jit.
    # TODO(synk): for d_out << 128 a lane-dense packed output slab (or bf16
    # output, if downstream allows) would further cut the output HBM stream.
    return out[:N, :d_out]


# ---------------------------------------------------------------------------
# EncoderAR port (host-side pieces + fused-kernel _forward_impl stand-in)
# ---------------------------------------------------------------------------
def generate_samp_mask(x, extrap_min, samp_frac, rng=None):
    """Host-side numpy sampling, mirroring EncoderAR.generate_samp_mask."""
    rng = np.random.default_rng(0) if rng is None else rng
    seq_len = x.shape[1]
    minimum_ind = int(seq_len * extrap_min)
    extrap_ind = int(rng.integers(minimum_ind, seq_len))
    valid_inds = np.arange(extrap_ind)
    n_inds = int(samp_frac * extrap_ind)
    return np.sort(rng.choice(valid_inds, n_inds, replace=False))


def select_by_length(hid_array, lengths):
    """Mirror of EncoderAR.select_by_length: keep the first lengths[i]
    timesteps of each sequence and pack them into (-1, D).  Lengths are
    host-known, so this is static slicing + concat (pure layout, no compute)."""
    lengths = [int(l) for l in np.asarray(lengths)]
    return jnp.concatenate(
        [hid_array[i, :l, :] for i, l in enumerate(lengths)], axis=0)


class EncoderARPallas:
    """JAX/Pallas port of EncoderAR with a fused Swish-MLP _forward_impl."""

    def __init__(self, params, use_bf16_mxu=True):
        # bf16 MXU by default on ALL generations (v5e's MXU is bf16-native; the
        # kernel keeps bias add + Swish in f32, so v5e's lack of a bf16 VPU/EUP
        # path is not a blocker).
        self.use_bf16_mxu = bool(use_bf16_mxu)
        mxu_dtype = jnp.bfloat16 if self.use_bf16_mxu else jnp.float32
        self.d_in = int(params[0][0].shape[0])
        self.d_out = int(params[-1][0].shape[1])
        # Hot-path hoist: pad (W, b) ONCE, already in the MXU dtype.
        self.padded_params = _pad_params(params, mxu_dtype)
        # Generation-aware scoped-VMEM cap, queried once.
        self.vmem_cap_bytes = _gen_aware_vmem_cap()

    def forward(self, x, tp, lens, args):
        aug = args['aug_args']
        samp_ind = generate_samp_mask(x, aug['s_min'], aug['s_frac'])
        hid_arr = self._forward_impl(x, tp, lens, samp_ind, aug['samp_prob'])
        return select_by_length(hid_arr, np.array(lens))

    def predict(self, x, tp, lens, args):
        aug = args['aug_args']
        samp_ind = generate_samp_mask(x, aug['s_min'], aug['s_frac'])
        hid_arr = self._forward_impl(x, tp, lens, samp_ind, 0)
        return select_by_length(hid_arr, np.array(lens))

    def _forward_impl(self, x, tp, lens, samp_ind, samp_prob):
        # TODO(synk): the reference EncoderAR leaves _forward_impl abstract
        # (NotImplementedError); this stand-in encodes each timestep with the
        # fused Swish-MLP kernel and ignores tp / samp_ind / samp_prob.
        B, T, D = x.shape
        hid = fused_mlp_forward(
            x.reshape(B * T, D), self.padded_params,
            d_out=self.d_out, use_bf16_mxu=self.use_bf16_mxu,
            vmem_cap_bytes=self.vmem_cap_bytes)
        return hid.reshape(B, T, -1)

    @staticmethod
    def get_longest_tp(tps, lens):
        ind = int(np.argmax(np.array(lens)))
        return tps[ind]


# ---------------------------------------------------------------------------
# Parameter init + plain-JAX reference
# ---------------------------------------------------------------------------
def init_mlp_params(key, input_dim, n_hidden, n_layer, output_dim,
                    dtype=jnp.float32):
    """Deterministic init mirroring nn.Linear shapes; W stored as (in, out)."""
    dims = [(input_dim, n_hidden)]
    dims += [(n_hidden, n_hidden) for _ in range(n_layer - 1)]
    dims += [(n_hidden, output_dim)]
    params = []
    for d_in, d_out in dims:
        key, kw, kb = jax.random.split(key, 3)
        bound = 1.0 / np.sqrt(d_in)
        w = jax.random.uniform(kw, (d_in, d_out), dtype, -bound, bound)
        b = jax.random.uniform(kb, (d_out,), dtype, -bound, bound)
        params.append((w, b))
    return params


def mlp_reference(params, x, *, use_bf16_mxu):
    """Plain-JAX reference with the same dtype policy as the kernel.
    (f32 reference uses Precision.HIGHEST; the kernel uses the Mosaic default
    f32 matmul decomposition, hence the loose f32 tolerance below.)"""
    mxu_dtype = jnp.bfloat16 if use_bf16_mxu else jnp.float32
    h = x
    for idx, (w, b) in enumerate(params):
        h = jnp.dot(h.astype(mxu_dtype), w.astype(mxu_dtype),
                    preferred_element_type=jnp.float32,
                    precision=jax.lax.Precision.HIGHEST) + b
        if idx != len(params) - 1:
            h = h * jax.nn.sigmoid(h)
    return h


if __name__ == "__main__":
    # Small shapes consistent with the module: sequences (batch=2, seq=16,
    # features=4); per-timestep encoder MLP with hidden width 32, 3 layers.
    batch, seq, input_dim = 2, 16, 4
    n_hidden, n_layer, output_dim = 32, 3, 32
    lens = [16, 11]

    key = jax.random.PRNGKey(0)
    kx, kp = jax.random.split(key)
    x = jax.random.normal(kx, (batch, seq, input_dim), jnp.float32)
    tp = jnp.broadcast_to(jnp.linspace(0.0, 1.0, seq), (batch, seq))
    args = {'aug_args': {'s_min': 0.5, 's_frac': 0.5, 'samp_prob': 0.3}}
    params = init_mlp_params(kp, input_dim, n_hidden, n_layer, output_dim)

    flat_x = x.reshape(batch * seq, input_dim)

    # --- f32 MXU path (structural check) ---
    enc_f32 = EncoderARPallas(params, use_bf16_mxu=False)
    out_f32 = jax.block_until_ready(enc_f32.forward(x, tp, lens, args))
    ref_hid_f32 = mlp_reference(params, flat_x, use_bf16_mxu=False)
    ref_out_f32 = select_by_length(ref_hid_f32.reshape(batch, seq, -1),
                                   np.array(lens))
    assert out_f32.shape == (sum(lens), output_dim), out_f32.shape
    assert jnp.allclose(out_f32, ref_out_f32, atol=2e-2, rtol=2e-2), \
        "f32 path mismatch vs reference"

    # --- bf16-MXU path (default perf path on all generations) ---
    enc_bf16 = EncoderARPallas(params, use_bf16_mxu=True)
    out_bf16 = jax.block_until_ready(enc_bf16.forward(x, tp, lens, args))
    ref_hid_bf16 = mlp_reference(params, flat_x, use_bf16_mxu=True)
    ref_out_bf16 = select_by_length(ref_hid_bf16.reshape(batch, seq, -1),
                                    np.array(lens))
    assert out_bf16.shape == (sum(lens), output_dim), out_bf16.shape
    assert jnp.allclose(out_bf16, ref_out_bf16, atol=5e-3, rtol=5e-3), \
        "bf16 path mismatch vs bf16 reference"
    assert jnp.allclose(out_bf16, ref_out_f32, atol=5e-2, rtol=5e-2), \
        "bf16 path drifted too far from f32 reference"

    print("KERNEL_OK")
</pallas_src>

<mosaic_0001>
module attributes {stable_mosaic.version = 11 : i64} {
  func.func @_fused_mlp_kernel(%arg0: i32, %arg1: memref<16x4xf32, #tpu.memory_space<vmem>>, %arg2: memref<128x128xf32, #tpu.memory_space<vmem>>, %arg3: memref<1x128xf32, #tpu.memory_space<vmem>>, %arg4: memref<128x128xf32, #tpu.memory_space<vmem>>, %arg5: memref<1x128xf32, #tpu.memory_space<vmem>>, %arg6: memref<128x128xf32, #tpu.memory_space<vmem>>, %arg7: memref<1x128xf32, #tpu.memory_space<vmem>>, %arg8: memref<128x128xf32, #tpu.memory_space<vmem>>, %arg9: memref<1x128xf32, #tpu.memory_space<vmem>>, %arg10: memref<16x128xf32, #tpu.memory_space<vmem>>, %arg11: memref<16x128xf32, #tpu.memory_space<vmem>>) attributes {dimension_semantics = [#tpu.dimension_semantics<parallel>], iteration_bounds = array<i64: 2>, scalar_prefetch = 0 : i64, scratch_operands = 1 : i64, tpu.core_type = #tpu.core_type<tc>, window_params = [{transform_indices = @transform_0, window_bounds = array<i64: 16, 4>}, {pipeline_mode = #tpu.pipeline_mode<synchronous>, transform_indices = @transform_1, window_bounds = array<i64: 128, 128>}, {pipeline_mode = #tpu.pipeline_mode<synchronous>, transform_indices = @transform_2, window_bounds = array<i64: 1, 128>}, {pipeline_mode = #tpu.pipeline_mode<synchronous>, transform_indices = @transform_3, window_bounds = array<i64: 128, 128>}, {pipeline_mode = #tpu.pipeline_mode<synchronous>, transform_indices = @transform_4, window_bounds = array<i64: 1, 128>}, {pipeline_mode = #tpu.pipeline_mode<synchronous>, transform_indices = @transform_5, window_bounds = array<i64: 128, 128>}, {pipeline_mode = #tpu.pipeline_mode<synchronous>, transform_indices = @transform_6, window_bounds = array<i64: 1, 128>}, {pipeline_mode = #tpu.pipeline_mode<synchronous>, transform_indices = @transform_7, window_bounds = array<i64: 128, 128>}, {pipeline_mode = #tpu.pipeline_mode<synchronous>, transform_indices = @transform_8, window_bounds = array<i64: 1, 128>}, {transform_indices = @transform_9, window_bounds = array<i64: 16, 128>}]} {
    %cst = arith.constant 0.000000e+00 : f32
    %0 = vector.broadcast %cst : f32 to vector<16x128xf32>
    %c0 = arith.constant 0 : index
    %c0_0 = arith.constant 0 : index
    %1 = vector.load %arg11[%c0, %c0_0] : memref<16x128xf32, #tpu.memory_space<vmem>>, vector<16x128xf32>
    tpu.vector_store %arg11[%c0, %c0_0], %0 {strides = array<i32>} : memref<16x128xf32, #tpu.memory_space<vmem>>, vector<16x128xf32>,
    %c0_1 = arith.constant 0 : index
    %c0_2 = arith.constant 0 : index
    %2 = vector.load %arg1[%c0_1, %c0_2] : memref<16x4xf32, #tpu.memory_space<vmem>>, vector<16x4xf32>
    %c0_3 = arith.constant 0 : index
    %c0_4 = arith.constant 0 : index
    %3 = vector.load %arg11[%c0_3, %c0_4] : memref<16x128xf32, #tpu.memory_space<vmem>>, vector<16x4xf32>
    tpu.vector_store %arg11[%c0_3, %c0_4], %2 {strides = array<i32>} : memref<16x128xf32, #tpu.memory_space<vmem>>, vector<16x4xf32>,
    %c0_5 = arith.constant 0 : index
    %c0_6 = arith.constant 0 : index
    %4 = vector.load %arg11[%c0_5, %c0_6] : memref<16x128xf32, #tpu.memory_space<vmem>>, vector<16x128xf32>
    %c0_7 = arith.constant 0 : index
    %c0_8 = arith.constant 0 : index
    %5 = vector.load %arg2[%c0_7, %c0_8] : memref<128x128xf32, #tpu.memory_space<vmem>>, vector<128x128xf32>
    %cst_9 = arith.constant dense<0.000000e+00> : vector<16x128xf32>
    %6 = tpu.matmul %4, %5, %cst_9 {dimension_numbers = #tpu.dot_dimension_numbers<[1], [0], [0], [1], [0, 0, 1, 1], [], []>} : vector<16x128xf32>, vector<128x128xf32>, vector<16x128xf32> -> vector<16x128xf32>
    %c0_10 = arith.constant 0 : index
    %c0_11 = arith.constant 0 : index
    %7 = vector.load %arg3[%c0_10, %c0_11] : memref<1x128xf32, #tpu.memory_space<vmem>>, vector<1x128xf32>
    %8 = vector.broadcast %7 : vector<1x128xf32> to vector<16x128xf32>
    %9 = arith.addf %6, %8 : vector<16x128xf32>
    %10 = arith.negf %9 : vector<16x128xf32>
    %11 = math.exp %10 : vector<16x128xf32>
    %cst_12 = arith.constant 1.000000e+00 : f32
    %12 = vector.broadcast %cst_12 : f32 to vector<16x128xf32>
    %13 = arith.addf %12, %11 : vector<16x128xf32>
    %14 = arith.divf %12, %13 : vector<16x128xf32>
    %15 = arith.mulf %9, %14 : vector<16x128xf32>
    %c0_13 = arith.constant 0 : index
    %c0_14 = arith.constant 0 : index
    %16 = vector.load %arg4[%c0_13, %c0_14] : memref<128x128xf32, #tpu.memory_space<vmem>>, vector<128x128xf32>
    %cst_15 = arith.constant dense<0.000000e+00> : vector<16x128xf32>
    %17 = tpu.matmul %15, %16, %cst_15 {dimension_numbers = #tpu.dot_dimension_numbers<[1], [0], [0], [1], [0, 0, 1, 1], [], []>} : vector<16x128xf32>, vector<128x128xf32>, vector<16x128xf32> -> vector<16x128xf32>
    %c0_16 = arith.constant 0 : index
    %c0_17 = arith.constant 0 : index
    %18 = vector.load %arg5[%c0_16, %c0_17] : memref<1x128xf32, #tpu.memory_space<vmem>>, vector<1x128xf32>
    %19 = vector.broadcast %18 : vector<1x128xf32> to vector<16x128xf32>
    %20 = arith.addf %17, %19 : vector<16x128xf32>
    %21 = arith.negf %20 : vector<16x128xf32>
    %22 = math.exp %21 : vector<16x128xf32>
    %cst_18 = arith.constant 1.000000e+00 : f32
    %23 = vector.broadcast %cst_18 : f32 to vector<16x128xf32>
    %24 = arith.addf %23, %22 : vector<16x128xf32>
    %25 = arith.divf %23, %24 : vector<16x128xf32>
    %26 = arith.mulf %20, %25 : vector<16x128xf32>
    %c0_19 = arith.constant 0 : index
    %c0_20 = arith.constant 0 : index
    %27 = vector.load %arg6[%c0_19, %c0_20] : memref<128x128xf32, #tpu.memory_space<vmem>>, vector<128x128xf32>
    %cst_21 = arith.constant dense<0.000000e+00> : vector<16x128xf32>
    %28 = tpu.matmul %26, %27, %cst_21 {dimension_numbers = #tpu.dot_dimension_numbers<[1], [0], [0], [1], [0, 0, 1, 1], [], []>} : vector<16x128xf32>, vector<128x128xf32>, vector<16x128xf32> -> vector<16x128xf32>
    %c0_22 = arith.constant 0 : index
    %c0_23 = arith.constant 0 : index
    %29 = vector.load %arg7[%c0_22, %c0_23] : memref<1x128xf32, #tpu.memory_space<vmem>>, vector<1x128xf32>
    %30 = vector.broadcast %29 : vector<1x128xf32> to vector<16x128xf32>
    %31 = arith.addf %28, %30 : vector<16x128xf32>
    %32 = arith.negf %31 : vector<16x128xf32>
    %33 = math.exp %32 : vector<16x128xf32>
    %cst_24 = arith.constant 1.000000e+00 : f32
    %34 = vector.broadcast %cst_24 : f32 to vector<16x128xf32>
    %35 = arith.addf %34, %33 : vector<16x128xf32>
    %36 = arith.divf %34, %35 : vector<16x128xf32>
    %37 = arith.mulf %31, %36 : vector<16x128xf32>
    %c0_25 = arith.constant 0 : index
    %c0_26 = arith.constant 0 : index
    %38 = vector.load %arg8[%c0_25, %c0_26] : memref<128x128xf32, #tpu.memory_space<vmem>>, vector<128x128xf32>
    %cst_27 = arith.constant dense<0.000000e+00> : vector<16x128xf32>
    %39 = tpu.matmul %37, %38, %cst_27 {dimension_numbers = #tpu.dot_dimension_numbers<[1], [0], [0], [1], [0, 0, 1, 1], [], []>} : vector<16x128xf32>, vector<128x128xf32>, vector<16x128xf32> -> vector<16x128xf32>
    %c0_28 = arith.constant 0 : index
    %c0_29 = arith.constant 0 : index
    %40 = vector.load %arg9[%c0_28, %c0_29] : memref<1x128xf32, #tpu.memory_space<vmem>>, vector<1x128xf32>
    %41 = vector.broadcast %40 : vector<1x128xf32> to vector<16x128xf32>
    %42 = arith.addf %39, %41 : vector<16x128xf32>
    %c0_30 = arith.constant 0 : index
    %c0_31 = arith.constant 0 : index
    %43 = vector.load %arg10[%c0_30, %c0_31] : memref<16x128xf32, #tpu.memory_space<vmem>>, vector<16x128xf32>
    tpu.vector_store %arg10[%c0_30, %c0_31], %42 {strides = array<i32>} : memref<16x128xf32, #tpu.memory_space<vmem>>, vector<16x128xf32>,
    return
  }
  func.func @transform_0(%arg0: i32) -> (i32, i32) {
    %c0_i32 = arith.constant 0 : i32
    %c0_i32_0 = arith.constant 0 : i32
    return %arg0, %c0_i32 : i32, i32
  }
  func.func @transform_1(%arg0: i32) -> (i32, i32) {
    %c0_i32 = arith.constant 0 : i32
    %c0_i32_0 = arith.constant 0 : i32
    %c0_i32_1 = arith.constant 0 : i32
    return %c0_i32, %c0_i32_0 : i32, i32
  }
  func.func @transform_2(%arg0: i32) -> (i32, i32) {
    %c0_i32 = arith.constant 0 : i32
    %c0_i32_0 = arith.constant 0 : i32
    %c0_i32_1 = arith.constant 0 : i32
    return %c0_i32, %c0_i32_0 : i32, i32
  }
  func.func @transform_3(%arg0: i32) -> (i32, i32) {
    %c0_i32 = arith.constant 0 : i32
    %c0_i32_0 = arith.constant 0 : i32
    %c0_i32_1 = arith.constant 0 : i32
    return %c0_i32, %c0_i32_0 : i32, i32
  }
  func.func @transform_4(%arg0: i32) -> (i32, i32) {
    %c0_i32 = arith.constant 0 : i32
    %c0_i32_0 = arith.constant 0 : i32
    %c0_i32_1 = arith.constant 0 : i32
    return %c0_i32, %c0_i32_0 : i32, i32
  }
  func.func @transform_5(%arg0: i32) -> (i32, i32) {
    %c0_i32 = arith.constant 0 : i32
    %c0_i32_0 = arith.constant 0 : i32
    %c0_i32_1 = arith.constant 0 : i32
    return %c0_i32, %c0_i32_0 : i32, i32
  }
  func.func @transform_6(%arg0: i32) -> (i32, i32) {
    %c0_i32 = arith.constant 0 : i32
    %c0_i32_0 = arith.constant 0 : i32
    %c0_i32_1 = arith.constant 0 : i32
    return %c0_i32, %c0_i32_0 : i32, i32
  }
  func.func @transform_7(%arg0: i32) -> (i32, i32) {
    %c0_i32 = arith.constant 0 : i32
    %c0_i32_0 = arith.constant 0 : i32
    %c0_i32_1 = arith.constant 0 : i32
    return %c0_i32, %c0_i32_0 : i32, i32
  }
  func.func @transform_8(%arg0: i32) -> (i32, i32) {
    %c0_i32 = arith.constant 0 : i32
    %c0_i32_0 = arith.constant 0 : i32
    %c0_i32_1 = arith.constant 0 : i32
    return %c0_i32, %c0_i32_0 : i32, i32
  }
  func.func @transform_9(%arg0: i32) -> (i32, i32) {
    %c0_i32 = arith.constant 0 : i32
    %c0_i32_0 = arith.constant 0 : i32
    return %arg0, %c0_i32 : i32, i32
  }
}

</mosaic_0001>

<llo_original>
// kernel: fused_mlp_forward.1
$region0: #{fused_mlp_forward.1}
  #allocation0 [shape = 'u32[]', space=smem, size = 0x4, offset = 0x4, fixed_abs, tag = 'smem constant byte address 0x4 - core index']
  #allocation1 [shape = 'u32[72,128]{1,0:T(1,128)}', space=vmem, size = 0x9000, scoped, tag = 'internal scratch']
  #allocation2 [shape = 'f32[16,128]{1,0:T(8,128)}', space=vmem, size = 0x2000, scoped, tag = 'scratch operand']
  %s0 = inlined_call_operand.vmem [shape: f32[32,4], index: 0, kind: input, shape index: {}]
  %s1 = inlined_call_operand.hbm [shape: f32[128,128], index: 1, kind: input, shape index: {}]
  %s2 = inlined_call_operand.vmem [shape: f32[1,128], index: 2, kind: input, shape index: {}]
  %s3 = inlined_call_operand.hbm [shape: f32[128,128], index: 3, kind: input, shape index: {}]
  %s4 = inlined_call_operand.vmem [shape: f32[1,128], index: 4, kind: input, shape index: {}]
  %s5 = inlined_call_operand.hbm [shape: f32[128,128], index: 5, kind: input, shape index: {}]
  %s6 = inlined_call_operand.vmem [shape: f32[1,128], index: 6, kind: input, shape index: {}]
  %s7 = inlined_call_operand.hbm [shape: f32[128,128], index: 7, kind: input, shape index: {}]
  %s8 = inlined_call_operand.vmem [shape: f32[1,128], index: 8, kind: input, shape index: {}]
  %s9 = inlined_call_operand.hbm [shape: f32[32,128], index: 9, kind: output, shape index: {}]
  %s10 = sld [smem:[#allocation0]]
  $region85: #{fused_mlp_forward.1} parent=0
    _
  %s12 = ssub.s32 1, %s10
  %s13 = scalar_select 0, %s12, %s10
  $region1: #{fused_mlp_forward.1} parent=0
    #allocation3 [shape = 'u8[65536]{0}', space=vmem, size = 0x10000, scoped, tag = 'input window, operand 1, single buffered']
    #allocation4 [shape = 's32[2]{0}', space=sflag, size = 0x8, scoped, tag = 'scoped memory for fused_mlp_forward.1']
    #allocation5 [shape = 's32[2]{0}', space=sflag, size = 0x8, scoped, tag = 'scoped memory for fused_mlp_forward.1']
    #allocation6 [shape = 'u8[65536]{0}', space=vmem, size = 0x10000, scoped, tag = 'input window, operand 3, single buffered']
    #allocation7 [shape = 's32[1]{0}', space=sflag, size = 0x4, scoped, tag = 'scoped memory for fused_mlp_forward.1']
    #allocation8 [shape = 'u8[65536]{0}', space=vmem, size = 0x10000, scoped, tag = 'input window, operand 5, single buffered']
    #allocation9 [shape = 'u8[65536]{0}', space=vmem, size = 0x10000, scoped, tag = 'input window, operand 7, single buffered']
    #allocation10 [shape = 's32[1]{0}', space=sflag, size = 0x4, scoped, tag = 'scoped memory for fused_mlp_forward.1']
    #allocation11 [shape = 'u8[16384]{0}', space=vmem, size = 0x4000, scoped, tag = 'output window, operand 0']
    %14 = vsyncpa [#allocation4], 0
    %15 = vsyncpa [#allocation7], 0
    %16 = vsyncpa [#allocation10], 0
    %17 = vsyncpa [#allocation5], 0
    %s18 = scalar_lea.sflag [#allocation5], 1
    %19 = vsyncpa %s18, 0
    loop: start=0, step=1, limit=4
    $region2: #{fused_mlp_forward.1} parent=1 // loop_pre_header
      _
    $region3: #{fused_mlp_forward.1} parent=1 // loop_header
      %s21 = sphi 0, %s25
      %p22 = scmp.ge.s32.totalorder %s21, 4
      %s31 = sphi 0, %s33
      %s34 = sphi 0, %s31
      %s35 = sphi 0, %s34
      %s51 = sphi 0, %s35
      %s55 = sphi 0, %s55
      %s57 = sphi 0, %s55
      %s58 = sphi 0, %s57
      %s72 = sphi 0, %s58
      %s76 = sphi 0, %s76
      %s78 = sphi 0, %s76
      %s79 = sphi 0, %s78
      %s93 = sphi 0, %s79
      %s97 = sphi 0, %s97
      %s99 = sphi 0, %s97
      %s100 = sphi 0, %s99
      %s114 = sphi 0, %s100
      %s118 = sphi 0, %s118
      %s120 = sphi 0, %s118
      %s121 = sphi 0, %s120
      %s135 = sphi 0, %s121
      %s139 = sphi 0, %s139
      %s141 = sphi 0, %s139
      %s142 = sphi 0, %s141
      %s156 = sphi 0, %s142
      %s160 = sphi 0, %s160
      %s162 = sphi 0, %s160
      %s163 = sphi 0, %s162
      %s177 = sphi 0, %s163
      %s181 = sphi 0, %s181
      %s183 = sphi 0, %s181
      %s184 = sphi 0, %s183
      %s198 = sphi 0, %s184
      %s202 = sphi 0, %s202
      %s204 = sphi 0, %s202
      %s205 = sphi 0, %s204
      %s219 = sphi 0, %s205
      %s225 = sphi 0, %s227
      %s228 = sphi 0, %s225
      %s229 = sphi 0, %s228
      %s245 = sphi 0, %s229
    $region4: #{fused_mlp_forward.1} parent=1 // loop_header_branch
      %24 = sbr.rel (%p22) target = $region8
    $region5: #{fused_mlp_forward.1} parent=1 // loop_body
      %s26 = ssub.s32 %s21, 1
      %s27 = ssub.s32 %s21, 2
      %s28 = sadd.s32 %s21, 1
      %s29 = ssub.s32 %s21, %s28
      %p30 = scmp.eq.s32.totalorder %s29, 0
      %s32 = sadd.s32 %s31, 1
      %s33 = scalar_select %p30, %s31, %s32
      %p36 = pneg %p30
      %p37 = scmp.eq.s32.totalorder %s21, 1
      %p38 = por %p36, %p37
      %p39 = scmp.ne.s32.totalorder %s31, %s34
      %p40 = scmp.eq.s32.totalorder %s21, 0
      %p41 = por %p39, %p40
      %p42 = scmp.ne.s32.totalorder %s31, %s34
      %p43 = scmp.eq.s32.totalorder %s26, 1
      %p44 = por %p42, %p43
      %p45 = scmp.ne.s32.totalorder %s34, %s35
      %p46 = scmp.eq.s32.totalorder %s26, 0
      %p47 = por %p45, %p46
      %p48 = scmp.ne.s32.totalorder %s34, %s35
      %p49 = scmp.eq.s32.totalorder %s27, 1
      %p50 = por %p48, %p49
      %p52 = scmp.ne.s32.totalorder %s35, %s51
      %p53 = scmp.eq.s32.totalorder %s27, 0
      %p54 = por %p52, %p53
      %s56 = sadd.s32 %s55, 1
      %p59 = scmp.eq.s32.totalorder %s21, 1
      %p60 = scmp.ne.s32.totalorder %s55, %s57
      %p61 = scmp.eq.s32.totalorder %s21, 0
      %p62 = por %p60, %p61
      %p63 = scmp.ne.s32.totalorder %s55, %s57
      %p64 = scmp.eq.s32.totalorder %s26, 1
      %p65 = por %p63, %p64
      %p66 = scmp.ne.s32.totalorder %s57, %s58
      %p67 = scmp.eq.s32.totalorder %s26, 0
      %p68 = por %p66, %p67
      %p69 = scmp.ne.s32.totalorder %s57, %s58
      %p70 = scmp.eq.s32.totalorder %s27, 1
      %p71 = por %p69, %p70
      %p73 = scmp.ne.s32.totalorder %s58, %s72
      %p74 = scmp.eq.s32.totalorder %s27, 0
      %p75 = por %p73, %p74
      %s77 = sadd.s32 %s76, 1
      %p80 = scmp.eq.s32.totalorder %s21, 1
      %p81 = scmp.ne.s32.totalorder %s76, %s78
      %p82 = scmp.eq.s32.totalorder %s21, 0
      %p83 = por %p81, %p82
      %p84 = scmp.ne.s32.totalorder %s76, %s78
      %p85 = scmp.eq.s32.totalorder %s26, 1
      %p86 = por %p84, %p85
      %p87 = scmp.ne.s32.totalorder %s78, %s79
      %p88 = scmp.eq.s32.totalorder %s26, 0
      %p89 = por %p87, %p88
      %p90 = scmp.ne.s32.totalorder %s78, %s79
      %p91 = scmp.eq.s32.totalorder %s27, 1
      %p92 = por %p90, %p91
      %p94 = scmp.ne.s32.totalorder %s79, %s93
      %p95 = scmp.eq.s32.totalorder %s27, 0
      %p96 = por %p94, %p95
      %s98 = sadd.s32 %s97, 1
      %p101 = scmp.eq.s32.totalorder %s21, 1
      %p102 = scmp.ne.s32.totalorder %s97, %s99
      %p103 = scmp.eq.s32.totalorder %s21, 0
      %p104 = por %p102, %p103
      %p105 = scmp.ne.s32.totalorder %s97, %s99
      %p106 = scmp.eq.s32.totalorder %s26, 1
      %p107 = por %p105, %p106
      %p108 = scmp.ne.s32.totalorder %s99, %s100
      %p109 = scmp.eq.s32.totalorder %s26, 0
      %p110 = por %p108, %p109
      %p111 = scmp.ne.s32.totalorder %s99, %s100
      %p112 = scmp.eq.s32.totalorder %s27, 1
      %p113 = por %p111, %p112
      %p115 = scmp.ne.s32.totalorder %s100, %s114
      %p116 = scmp.eq.s32.totalorder %s27, 0
      %p117 = por %p115, %p116
      %s119 = sadd.s32 %s118, 1
      %p122 = scmp.eq.s32.totalorder %s21, 1
      %p123 = scmp.ne.s32.totalorder %s118, %s120
      %p124 = scmp.eq.s32.totalorder %s21, 0
      %p125 = por %p123, %p124
      %p126 = scmp.ne.s32.totalorder %s118, %s120
      %p127 = scmp.eq.s32.totalorder %s26, 1
      %p128 = por %p126, %p127
      %p129 = scmp.ne.s32.totalorder %s120, %s121
      %p130 = scmp.eq.s32.totalorder %s26, 0
      %p131 = por %p129, %p130
      %p132 = scmp.ne.s32.totalorder %s120, %s121
      %p133 = scmp.eq.s32.totalorder %s27, 1
      %p134 = por %p132, %p133
      %p136 = scmp.ne.s32.totalorder %s121, %s135
      %p137 = scmp.eq.s32.totalorder %s27, 0
      %p138 = por %p136, %p137
      %s140 = sadd.s32 %s139, 1
      %p143 = scmp.eq.s32.totalorder %s21, 1
      %p144 = scmp.ne.s32.totalorder %s139, %s141
      %p145 = scmp.eq.s32.totalorder %s21, 0
      %p146 = por %p144, %p145
      %p147 = scmp.ne.s32.totalorder %s139, %s141
      %p148 = scmp.eq.s32.totalorder %s26, 1
      %p149 = por %p147, %p148
      %p150 = scmp.ne.s32.totalorder %s141, %s142
      %p151 = scmp.eq.s32.totalorder %s26, 0
      %p152 = por %p150, %p151
      %p153 = scmp.ne.s32.totalorder %s141, %s142
      %p154 = scmp.eq.s32.totalorder %s27, 1
      %p155 = por %p153, %p154
      %p157 = scmp.ne.s32.totalorder %s142, %s156
      %p158 = scmp.eq.s32.totalorder %s27, 0
      %p159 = por %p157, %p158
      %s161 = sadd.s32 %s160, 1
      %p164 = scmp.eq.s32.totalorder %s21, 1
      %p165 = scmp.ne.s32.totalorder %s160, %s162
      %p166 = scmp.eq.s32.totalorder %s21, 0
      %p167 = por %p165, %p166
      %p168 = scmp.ne.s32.totalorder %s160, %s162
      %p169 = scmp.eq.s32.totalorder %s26, 1
      %p170 = por %p168, %p169
      %p171 = scmp.ne.s32.totalorder %s162, %s163
      %p172 = scmp.eq.s32.totalorder %s26, 0
      %p173 = por %p171, %p172
      %p174 = scmp.ne.s32.totalorder %s162, %s163
      %p175 = scmp.eq.s32.totalorder %s27, 1
      %p176 = por %p174, %p175
      %p178 = scmp.ne.s32.totalorder %s163, %s177
      %p179 = scmp.eq.s32.totalorder %s27, 0
      %p180 = por %p178, %p179
      %s182 = sadd.s32 %s181, 1
      %p185 = scmp.eq.s32.totalorder %s21, 1
      %p186 = scmp.ne.s32.totalorder %s181, %s183
      %p187 = scmp.eq.s32.totalorder %s21, 0
      %p188 = por %p186, %p187
      %p189 = scmp.ne.s32.totalorder %s181, %s183
      %p190 = scmp.eq.s32.totalorder %s26, 1
      %p191 = por %p189, %p190
      %p192 = scmp.ne.s32.totalorder %s183, %s184
      %p193 = scmp.eq.s32.totalorder %s26, 0
      %p194 = por %p192, %p193
      %p195 = scmp.ne.s32.totalorder %s183, %s184
      %p196 = scmp.eq.s32.totalorder %s27, 1
      %p197 = por %p195, %p196
      %p199 = scmp.ne.s32.totalorder %s184, %s198
      %p200 = scmp.eq.s32.totalorder %s27, 0
      %p201 = por %p199, %p200
      %s203 = sadd.s32 %s202, 1
      %p206 = scmp.eq.s32.totalorder %s21, 1
      %p207 = scmp.ne.s32.totalorder %s202, %s204
      %p208 = scmp.eq.s32.totalorder %s21, 0
      %p209 = por %p207, %p208
      %p210 = scmp.ne.s32.totalorder %s202, %s204
      %p211 = scmp.eq.s32.totalorder %s26, 1
      %p212 = por %p210, %p211
      %p213 = scmp.ne.s32.totalorder %s204, %s205
      %p214 = scmp.eq.s32.totalorder %s26, 0
      %p215 = por %p213, %p214
      %p216 = scmp.ne.s32.totalorder %s204, %s205
      %p217 = scmp.eq.s32.totalorder %s27, 1
      %p218 = por %p216, %p217
      %p220 = scmp.ne.s32.totalorder %s205, %s219
      %p221 = scmp.eq.s32.totalorder %s27, 0
      %p222 = por %p220, %p221
      %s223 = ssub.s32 %s21, %s28
      %p224 = scmp.eq.s32.totalorder %s223, 0
      %s226 = sadd.s32 %s225, 1
      %s227 = scalar_select %p224, %s225, %s226
      %p230 = pneg %p224
      %p231 = scmp.eq.s32.totalorder %s21, 1
      %p232 = por %p230, %p231
      %p233 = scmp.ne.s32.totalorder %s225, %s228
      %p234 = scmp.eq.s32.totalorder %s21, 0
      %p235 = por %p233, %p234
      %p236 = scmp.ne.s32.totalorder %s225, %s228
      %p237 = scmp.eq.s32.totalorder %s26, 1
      %p238 = por %p236, %p237
      %p239 = scmp.ne.s32.totalorder %s228, %s229
      %p240 = scmp.eq.s32.totalorder %s26, 0
      %p241 = por %p239, %p240
      %p242 = scmp.ne.s32.totalorder %s228, %s229
      %p243 = scmp.eq.s32.totalorder %s27, 1
      %p244 = por %p242, %p243
      %p246 = scmp.ne.s32.totalorder %s229, %s245
      %p247 = scmp.eq.s32.totalorder %s27, 0
      %p248 = por %p246, %p247
      %p249 = scmp.le.s32.totalorder 1, %s21
      %p250 = scmp.lt.s32.totalorder %s21, 3
      %p251 = pnand %p249, %p250
      %p252 = pneg %p251
      // Predicated region
      $region9: #{fused_mlp_forward.1} parent=5 // pred_check
        _
      $region10: #{fused_mlp_forward.1} parent=5 // pred_check_branch
        %254 = sbr.rel (%p251) target = $region12
      $region11: #{fused_mlp_forward.1} parent=5 // pred_region
        %s255 = ssub.s32 %s21, 1
        // Predicated region
        $region13: #{fused_mlp_forward.1} parent=11 // pred_check
          %p256 = pneg %p68
        $region14: #{fused_mlp_forward.1} parent=11 // pred_check_branch
          %258 = sbr.rel (%p256) target = $region16
        $region15: #{fused_mlp_forward.1} parent=11 // pred_region
          %260 = vsyncadd [#allocation4], 0
          %s261 = sshll.u32 %s1, 4
          %s262 = int_to_ptr.hbm [resolvable:$true] %s261
          %s263 = sshll.u32 [#allocation3], 4
          %s264 = int_to_ptr.vmem [resolvable:$true] %s263
          %269 = dma.hbm_to_vmem [thread:$0]  %s262, 2048, %s264, [#allocation4], 128, 128, 8
        $region16: #{fused_mlp_forward.1} parent=11 // pred_fallthru
          _
        // Predicated region
        $region17: #{fused_mlp_forward.1} parent=11 // pred_check
          %p270 = pneg %p89
        $region18: #{fused_mlp_forward.1} parent=11 // pred_check_branch
          %272 = sbr.rel (%p270) target = $region20
        $region19: #{fused_mlp_forward.1} parent=11 // pred_region
          _
        $region20: #{fused_mlp_forward.1} parent=11 // pred_fallthru
          _
        // Predicated region
        $region21: #{fused_mlp_forward.1} parent=11 // pred_check
          %p273 = pneg %p110
        $region22: #{fused_mlp_forward.1} parent=11 // pred_check_branch
          %275 = sbr.rel (%p273) target = $region24
        $region23: #{fused_mlp_forward.1} parent=11 // pred_region
          %277 = vsyncadd [#allocation7], 0
          %s278 = sshll.u32 %s3, 4
          %s279 = int_to_ptr.hbm [resolvable:$true] %s278
          %s280 = sshll.u32 [#allocation6], 4
          %s281 = int_to_ptr.vmem [resolvable:$true] %s280
          %286 = dma.hbm_to_vmem [thread:$0]  %s279, 2048, %s281, [#allocation7], 128, 128, 8
        $region24: #{fused_mlp_forward.1} parent=11 // pred_fallthru
          _
        // Predicated region
        $region25: #{fused_mlp_forward.1} parent=11 // pred_check
          %p287 = pneg %p131
        $region26: #{fused_mlp_forward.1} parent=11 // pred_check_branch
          %289 = sbr.rel (%p287) target = $region28
        $region27: #{fused_mlp_forward.1} parent=11 // pred_region
          _
        $region28: #{fused_mlp_forward.1} parent=11 // pred_fallthru
          _
        // Predicated region
        $region29: #{fused_mlp_forward.1} parent=11 // pred_check
          %p290 = pneg %p152
        $region30: #{fused_mlp_forward.1} parent=11 // pred_check_branch
          %292 = sbr.rel (%p290) target = $region32
        $region31: #{fused_mlp_forward.1} parent=11 // pred_region
          %294 = vsyncadd [#allocation7], 0
          %s295 = sshll.u32 %s5, 4
          %s296 = int_to_ptr.hbm [resolvable:$true] %s295
          %s297 = sshll.u32 [#allocation8], 4
          %s298 = int_to_ptr.vmem [resolvable:$true] %s297
          %303 = dma.hbm_to_vmem [thread:$0]  %s296, 2048, %s298, [#allocation7], 128, 128, 8
        $region32: #{fused_mlp_forward.1} parent=11 // pred_fallthru
          _
        // Predicated region
        $region33: #{fused_mlp_forward.1} parent=11 // pred_check
          %p304 = pneg %p173
        $region34: #{fused_mlp_forward.1} parent=11 // pred_check_branch
          %306 = sbr.rel (%p304) target = $region36
        $region35: #{fused_mlp_forward.1} parent=11 // pred_region
          _
        $region36: #{fused_mlp_forward.1} parent=11 // pred_fallthru
          _
        // Predicated region
        $region37: #{fused_mlp_forward.1} parent=11 // pred_check
          %p307 = pneg %p194
        $region38: #{fused_mlp_forward.1} parent=11 // pred_check_branch
          %309 = sbr.rel (%p307) target = $region40
        $region39: #{fused_mlp_forward.1} parent=11 // pred_region
          %311 = vsyncadd [#allocation10], 0
          %s312 = sshll.u32 %s7, 4
          %s313 = int_to_ptr.hbm [resolvable:$true] %s312
          %s314 = sshll.u32 [#allocation9], 4
          %s315 = int_to_ptr.vmem [resolvable:$true] %s314
          %320 = dma.hbm_to_vmem [thread:$0]  %s313, 2048, %s315, [#allocation10], 128, 128, 8
        $region40: #{fused_mlp_forward.1} parent=11 // pred_fallthru
          _
        // Predicated region
        $region41: #{fused_mlp_forward.1} parent=11 // pred_check
          %p321 = pneg %p215
        $region42: #{fused_mlp_forward.1} parent=11 // pred_check_branch
          %323 = sbr.rel (%p321) target = $region44
        $region43: #{fused_mlp_forward.1} parent=11 // pred_region
          _
        $region44: #{fused_mlp_forward.1} parent=11 // pred_fallthru
          _
      $region12: #{fused_mlp_forward.1} parent=5 // pred_fallthru
        _
      %p324 = scmp.lt.s32.totalorder %s21, 2
      // Predicated region
      $region45: #{fused_mlp_forward.1} parent=5 // pred_check
        %p325 = pneg %p324
      $region46: #{fused_mlp_forward.1} parent=5 // pred_check_branch
        %327 = sbr.rel (%p325) target = $region48
      $region47: #{fused_mlp_forward.1} parent=5 // pred_region
        // Predicated region
        $region49: #{fused_mlp_forward.1} parent=47 // pred_check
          %p328 = pneg %p41
        $region50: #{fused_mlp_forward.1} parent=47 // pred_check_branch
          %330 = sbr.rel (%p328) target = $region52
        $region51: #{fused_mlp_forward.1} parent=47 // pred_region
          %s331 = smul.u32 2, %s21
          %p332 = scmp.lt.s32.totalorder %s331, 3
          %s333 = scalar_select %p332, %s331, 3
          %s334 = smul.addr %s333, 8
          %s335 = scalar_lea.vmem %s0, %s334
          %s336 = smul.u32 2, %s21
        $region52: #{fused_mlp_forward.1} parent=47 // pred_fallthru
          _
      $region48: #{fused_mlp_forward.1} parent=5 // pred_fallthru
        _
      %p337 = scmp.le.s32.totalorder 1, %s21
      %p338 = scmp.lt.s32.totalorder %s21, 3
      %p339 = pnand %p337, %p338
      %p340 = pneg %p339
      // Predicated region
      $region53: #{fused_mlp_forward.1} parent=5 // pred_check
        _
      $region54: #{fused_mlp_forward.1} parent=5 // pred_check_branch
        %342 = sbr.rel (%p339) target = $region56
      $region55: #{fused_mlp_forward.1} parent=5 // pred_region
        %s343 = ssub.s32 %s21, 1
        // Predicated region
        $region57: #{fused_mlp_forward.1} parent=55 // pred_check
          %p344 = pneg %p68
        $region58: #{fused_mlp_forward.1} parent=55 // pred_check_branch
          %346 = sbr.rel (%p344) target = $region60
        $region59: #{fused_mlp_forward.1} parent=55 // pred_region
          %348 = dma.done [#allocation4], 2048
        $region60: #{fused_mlp_forward.1} parent=55 // pred_fallthru
          _
        // Predicated region
        $region61: #{fused_mlp_forward.1} parent=55 // pred_check
          %p349 = pneg %p110
        $region62: #{fused_mlp_forward.1} parent=55 // pred_check_branch
          %351 = sbr.rel (%p349) target = $region64
        $region63: #{fused_mlp_forward.1} parent=55 // pred_region
          %353 = dma.done [#allocation7], 2048
        $region64: #{fused_mlp_forward.1} parent=55 // pred_fallthru
          _
        // Predicated region
        $region65: #{fused_mlp_forward.1} parent=55 // pred_check
          %p354 = pneg %p152
        $region66: #{fused_mlp_forward.1} parent=55 // pred_check_branch
          %356 = sbr.rel (%p354) target = $region68
        $region67: #{fused_mlp_forward.1} parent=55 // pred_region
          %358 = dma.done [#allocation7], 2048
        $region68: #{fused_mlp_forward.1} parent=55 // pred_fallthru
          _
        // Predicated region
        $region69: #{fused_mlp_forward.1} parent=55 // pred_check
          %p359 = pneg %p194
        $region70: #{fused_mlp_forward.1} parent=55 // pred_check_branch
          %361 = sbr.rel (%p359) target = $region72
        $region71: #{fused_mlp_forward.1} parent=55 // pred_region
          %363 = dma.done [#allocation10], 2048
        $region72: #{fused_mlp_forward.1} parent=55 // pred_fallthru
          _
        %s364 = smul.u32 2, %s26
        %p365 = scmp.lt.s32.totalorder %s364, 3
        %s366 = scalar_select %p365, %s364, 3
        %s367 = smul.addr %s366, 8
        %s368 = scalar_lea.vmem %s0, %s367
        %p369 = pneg %p47
        %p370 = pneg %p44
        %p371 = pneg %p68
        %p372 = pneg %p65
        %p373 = pneg %p89
        %p374 = pneg %p86
        %p375 = pneg %p110
        %p376 = pneg %p107
        %p377 = pneg %p131
        %p378 = pneg %p128
        %p379 = pneg %p152
        %p380 = pneg %p149
        %p381 = pneg %p173
        %p382 = pneg %p170
        %p383 = pneg %p194
        %p384 = pneg %p191
        %p385 = pneg %p215
        %p386 = pneg %p212
        %p387 = pneg %p241
        %p388 = pneg %p238
        %s389 = sand.u32 %s228, 1
        %s390 = scalar_lea.sflag [#allocation5], %s389
        %s391 = sand.u32 %s228, 1
        %s392 = smul.addr %s391, 16
        %s393 = scalar_lea.vmem [#allocation11], %s392
        %s394 = smul.u32 2, %s26
        %p395 = scmp.lt.s32.totalorder %s394, 3
        %s396 = scalar_select %p395, %s394, 3
        %s397 = smul.addr %s396, 8
        %s398 = scalar_lea.vmem %s0, %s397
        %s399 = smul.u32 2, %s26
        %s400 = smul.u32 2, %s26
        %401 = vst [vmem:[#allocation2] sm:$0xff] 0.0
        %402 = vst [vmem:[#allocation2 + $0x8] sm:$0xff] 0.0
        %v403 = vld [vmem:[%s398] sm:$0xff]
        %v404 = vld [vmem:[%s398 + $0x8] sm:$0xff]
        %vm405 = vcmask 31744
        %406 = vst.msk [vmem:[#allocation2] sm:$0xff] %vm405, %v403
        %407 = vst.msk [vmem:[#allocation2 + $0x8] sm:$0xff] %vm405, %v404
        %v408 = vld [vmem:[#allocation2] sm:$0xff]
        %v409 = vld [vmem:[#allocation2 + $0x8] sm:$0xff]
        %v410 = vld [vmem:[#allocation3] sm:$0xff]
        %v411 = vld [vmem:[#allocation3 + $0x8] sm:$0xff]
        %v412 = vld [vmem:[#allocation3 + $0x10] sm:$0xff]
        %v413 = vld [vmem:[#allocation3 + $0x18] sm:$0xff]
        %v414 = vld [vmem:[#allocation3 + $0x20] sm:$0xff]
        %v415 = vld [vmem:[#allocation3 + $0x28] sm:$0xff]
        %v416 = vld [vmem:[#allocation3 + $0x30] sm:$0xff]
        %v417 = vld [vmem:[#allocation3 + $0x38] sm:$0xff]
        %v418 = vld [vmem:[#allocation3 + $0x40] sm:$0xff]
        %v419 = vld [vmem:[#allocation3 + $0x48] sm:$0xff]
        %v420 = vld [vmem:[#allocation3 + $0x50] sm:$0xff]
        %v421 = vld [vmem:[#allocation3 + $0x58] sm:$0xff]
        %v422 = vld [vmem:[#allocation3 + $0x60] sm:$0xff]
        %v423 = vld [vmem:[#allocation3 + $0x68] sm:$0xff]
        %v424 = vld [vmem:[#allocation3 + $0x70] sm:$0xff]
        %v425 = vld [vmem:[#allocation3 + $0x78] sm:$0xff]
        %v426 = vld [vmem:[%s2] sm:$0x1]
        %v428 = vperm.slane %v426, 0
        %430 = vmatpush.msra.mxu0 %v425
        %431 = vmatpush.msra.mxu0 %v424
        %432 = vmatpush.msra.mxu0 %v423
        %433 = vmatpush.msra.mxu0 %v422
        %434 = vmatpush.msra.mxu0 %v421
        %435 = vmatpush.msra.mxu0 %v420
        %436 = vmatpush.msra.mxu0 %v419
        %437 = vmatpush.msra.mxu0 %v418
        %438 = vmatpush.msra.mxu0 %v417
        %439 = vmatpush.msra.mxu0 %v416
        %440 = vmatpush.msra.mxu0 %v415
        %441 = vmatpush.msra.mxu0 %v414
        %442 = vmatpush.msra.mxu0 %v413
        %443 = vmatpush.msra.mxu0 %v412
        %444 = vmatpush.msra.mxu0 %v411
        %445 = vmatpush.msra.mxu0 %v410
        %446 = vmatmul.f32.gmra.mxu0 %v408
        %v447 = vpop.f32.mrf.mxu0
        %v448 = vadd.f32 %v428, %v447
        %449 = vmatmul.f32.gmra.mxu0 %v409
        %v450 = vpop.f32.mrf.mxu0
        %v451 = vadd.f32 %v428, %v450
        %452 = vdwg.mxu0
        %v453 = vxor.u32 %v448, 2147483648
        %v454 = vxor.u32 %v451, 2147483648
        %v455 = vmul.f32 %v453, 1.442695
        %v456 = vpow.pop %v455
        %v457 = vmul.f32 %v454, 1.442695
        %v458 = vpow.pop %v457
        %v459 = vadd.f32 %v456, 1.0
        %v460 = vadd.f32 %v458, 1.0
        %v461 = vrcp.pop %v459
        %v462 = vmul.f32 %v459, %v461
        %v463 = vsub.f32 1.0, %v462
        %v464 = vmul.f32 %v461, %v463
        %v465 = vadd.f32 %v461, %v464
        %vm466 = vweird.f32 %v459
        %vm467 = vweird.f32 %v461
        %vm468 = vmor %vm466, %vm467
        %v469 = vsel %vm468, %v461, %v465
        %v470 = vand.u32 2147483647, %v459
        %vm471 = vcmp.eq.f32.partialorder %v470, 8.507059e+37
        %v472 = vand.u32 %v459, 2147483648
        %v473 = vor.u32 1.1754944e-38, %v472
        %v474 = vsel %vm471, %v473, %v469
        %v475 = vmul.f32 1.0, %v474
        %v476 = vrcp.pop %v460
        %v477 = vmul.f32 %v460, %v476
        %v478 = vsub.f32 1.0, %v477
        %v479 = vmul.f32 %v476, %v478
        %v480 = vadd.f32 %v476, %v479
        %vm481 = vweird.f32 %v460
        %vm482 = vweird.f32 %v476
        %vm483 = vmor %vm481, %vm482
        %v484 = vsel %vm483, %v476, %v480
        %v485 = vand.u32 2147483647, %v460
        %vm486 = vcmp.eq.f32.partialorder %v485, 8.507059e+37
        %v487 = vand.u32 %v460, 2147483648
        %v488 = vor.u32 1.1754944e-38, %v487
        %v489 = vsel %vm486, %v488, %v484
        %v490 = vmul.f32 1.0, %v489
        %v491 = vmul.f32 %v448, %v475
        %v492 = vmul.f32 %v451, %v490
        %v493 = vld [vmem:[#allocation6] sm:$0xff]
        %v494 = vld [vmem:[#allocation6 + $0x8] sm:$0xff]
        %v495 = vld [vmem:[#allocation6 + $0x10] sm:$0xff]
        %v496 = vld [vmem:[#allocation6 + $0x18] sm:$0xff]
        %v497 = vld [vmem:[#allocation6 + $0x20] sm:$0xff]
        %v498 = vld [vmem:[#allocation6 + $0x28] sm:$0xff]
        %v499 = vld [vmem:[#allocation6 + $0x30] sm:$0xff]
        %v500 = vld [vmem:[#allocation6 + $0x38] sm:$0xff]
        %v501 = vld [vmem:[#allocation6 + $0x40] sm:$0xff]
        %v502 = vld [vmem:[#allocation6 + $0x48] sm:$0xff]
        %v503 = vld [vmem:[#allocation6 + $0x50] sm:$0xff]
        %v504 = vld [vmem:[#allocation6 + $0x58] sm:$0xff]
        %v505 = vld [vmem:[#allocation6 + $0x60] sm:$0xff]
        %v506 = vld [vmem:[#allocation6 + $0x68] sm:$0xff]
        %v507 = vld [vmem:[#allocation6 + $0x70] sm:$0xff]
        %v508 = vld [vmem:[#allocation6 + $0x78] sm:$0xff]
        %v509 = vld [vmem:[%s4] sm:$0x1]
        %v511 = vperm.slane %v509, 0
        %513 = vmatpush.msra.mxu0 %v508
        %514 = vmatpush.msra.mxu0 %v507
        %515 = vmatpush.msra.mxu0 %v506
        %516 = vmatpush.msra.mxu0 %v505
        %517 = vmatpush.msra.mxu0 %v504
        %518 = vmatpush.msra.mxu0 %v503
        %519 = vmatpush.msra.mxu0 %v502
        %520 = vmatpush.msra.mxu0 %v501
        %521 = vmatpush.msra.mxu0 %v500
        %522 = vmatpush.msra.mxu0 %v499
        %523 = vmatpush.msra.mxu0 %v498
        %524 = vmatpush.msra.mxu0 %v497
        %525 = vmatpush.msra.mxu0 %v496
        %526 = vmatpush.msra.mxu0 %v495
        %527 = vmatpush.msra.mxu0 %v494
        %528 = vmatpush.msra.mxu0 %v493
        %529 = vmatmul.f32.gmra.mxu0 %v491
        %v530 = vpop.f32.mrf.mxu0
        %v531 = vadd.f32 %v511, %v530
        %532 = vmatmul.f32.gmra.mxu0 %v492
        %v533 = vpop.f32.mrf.mxu0
        %v534 = vadd.f32 %v511, %v533
        %535 = vdwg.mxu0
        %v536 = vxor.u32 %v531, 2147483648
        %v537 = vxor.u32 %v534, 2147483648
        %v538 = vmul.f32 %v536, 1.442695
        %v539 = vpow.pop %v538
        %v540 = vmul.f32 %v537, 1.442695
        %v541 = vpow.pop %v540
        %v542 = vadd.f32 %v539, 1.0
        %v543 = vadd.f32 %v541, 1.0
        %v544 = vrcp.pop %v542
        %v545 = vmul.f32 %v542, %v544
        %v546 = vsub.f32 1.0, %v545
        %v547 = vmul.f32 %v544, %v546
        %v548 = vadd.f32 %v544, %v547
        %vm549 = vweird.f32 %v542
        %vm550 = vweird.f32 %v544
        %vm551 = vmor %vm549, %vm550
        %v552 = vsel %vm551, %v544, %v548
        %v553 = vand.u32 2147483647, %v542
        %vm554 = vcmp.eq.f32.partialorder %v553, 8.507059e+37
        %v555 = vand.u32 %v542, 2147483648
        %v556 = vor.u32 1.1754944e-38, %v555
        %v557 = vsel %vm554, %v556, %v552
        %v558 = vmul.f32 1.0, %v557
        %v559 = vrcp.pop %v543
        %v560 = vmul.f32 %v543, %v559
        %v561 = vsub.f32 1.0, %v560
        %v562 = vmul.f32 %v559, %v561
        %v563 = vadd.f32 %v559, %v562
        %vm564 = vweird.f32 %v543
        %vm565 = vweird.f32 %v559
        %vm566 = vmor %vm564, %vm565
        %v567 = vsel %vm566, %v559, %v563
        %v568 = vand.u32 2147483647, %v543
        %vm569 = vcmp.eq.f32.partialorder %v568, 8.507059e+37
        %v570 = vand.u32 %v543, 2147483648
        %v571 = vor.u32 1.1754944e-38, %v570
        %v572 = vsel %vm569, %v571, %v567
        %v573 = vmul.f32 1.0, %v572
        %v574 = vmul.f32 %v531, %v558
        %v575 = vmul.f32 %v534, %v573
        %v576 = vld [vmem:[#allocation8] sm:$0xff]
        %v577 = vld [vmem:[#allocation8 + $0x8] sm:$0xff]
        %v578 = vld [vmem:[#allocation8 + $0x10] sm:$0xff]
        %v579 = vld [vmem:[#allocation8 + $0x18] sm:$0xff]
        %v580 = vld [vmem:[#allocation8 + $0x20] sm:$0xff]
        %v581 = vld [vmem:[#allocation8 + $0x28] sm:$0xff]
        %v582 = vld [vmem:[#allocation8 + $0x30] sm:$0xff]
        %v583 = vld [vmem:[#allocation8 + $0x38] sm:$0xff]
        %v584 = vld [vmem:[#allocation8 + $0x40] sm:$0xff]
        %v585 = vld [vmem:[#allocation8 + $0x48] sm:$0xff]
        %v586 = vld [vmem:[#allocation8 + $0x50] sm:$0xff]
        %v587 = vld [vmem:[#allocation8 + $0x58] sm:$0xff]
        %v588 = vld [vmem:[#allocation8 + $0x60] sm:$0xff]
        %v589 = vld [vmem:[#allocation8 + $0x68] sm:$0xff]
        %v590 = vld [vmem:[#allocation8 + $0x70] sm:$0xff]
        %v591 = vld [vmem:[#allocation8 + $0x78] sm:$0xff]
        %v592 = vld [vmem:[%s6] sm:$0x1]
        %v594 = vperm.slane %v592, 0
        %596 = vmatpush.msra.mxu0 %v591
        %597 = vmatpush.msra.mxu0 %v590
        %598 = vmatpush.msra.mxu0 %v589
        %599 = vmatpush.msra.mxu0 %v588
        %600 = vmatpush.msra.mxu0 %v587
        %601 = vmatpush.msra.mxu0 %v586
        %602 = vmatpush.msra.mxu0 %v585
        %603 = vmatpush.msra.mxu0 %v584
        %604 = vmatpush.msra.mxu0 %v583
        %605 = vmatpush.msra.mxu0 %v582
        %606 = vmatpush.msra.mxu0 %v581
        %607 = vmatpush.msra.mxu0 %v580
        %608 = vmatpush.msra.mxu0 %v579
        %609 = vmatpush.msra.mxu0 %v578
        %610 = vmatpush.msra.mxu0 %v577
        %611 = vmatpush.msra.mxu0 %v576
        %612 = vmatmul.f32.gmra.mxu0 %v574
        %v613 = vpop.f32.mrf.mxu0
        %v614 = vadd.f32 %v594, %v613
        %615 = vmatmul.f32.gmra.mxu0 %v575
        %v616 = vpop.f32.mrf.mxu0
        %v617 = vadd.f32 %v594, %v616
        %618 = vdwg.mxu0
        %v619 = vxor.u32 %v614, 2147483648
        %v620 = vxor.u32 %v617, 2147483648
        %v621 = vmul.f32 %v619, 1.442695
        %v622 = vpow.pop %v621
        %v623 = vmul.f32 %v620, 1.442695
        %v624 = vpow.pop %v623
        %v625 = vadd.f32 %v622, 1.0
        %v626 = vadd.f32 %v624, 1.0
        %v627 = vrcp.pop %v625
        %v628 = vmul.f32 %v625, %v627
        %v629 = vsub.f32 1.0, %v628
        %v630 = vmul.f32 %v627, %v629
        %v631 = vadd.f32 %v627, %v630
        %vm632 = vweird.f32 %v625
        %vm633 = vweird.f32 %v627
        %vm634 = vmor %vm632, %vm633
        %v635 = vsel %vm634, %v627, %v631
        %v636 = vand.u32 2147483647, %v625
        %vm637 = vcmp.eq.f32.partialorder %v636, 8.507059e+37
        %v638 = vand.u32 %v625, 2147483648
        %v639 = vor.u32 1.1754944e-38, %v638
        %v640 = vsel %vm637, %v639, %v635
        %v641 = vmul.f32 1.0, %v640
        %v642 = vrcp.pop %v626
        %v643 = vmul.f32 %v626, %v642
        %v644 = vsub.f32 1.0, %v643
        %v645 = vmul.f32 %v642, %v644
        %v646 = vadd.f32 %v642, %v645
        %vm647 = vweird.f32 %v626
        %vm648 = vweird.f32 %v642
        %vm649 = vmor %vm647, %vm648
        %v650 = vsel %vm649, %v642, %v646
        %v651 = vand.u32 2147483647, %v626
        %vm652 = vcmp.eq.f32.partialorder %v651, 8.507059e+37
        %v653 = vand.u32 %v626, 2147483648
        %v654 = vor.u32 1.1754944e-38, %v653
        %v655 = vsel %vm652, %v654, %v650
        %v656 = vmul.f32 1.0, %v655
        %v657 = vmul.f32 %v614, %v641
        %v658 = vmul.f32 %v617, %v656
        %v659 = vld [vmem:[#allocation9] sm:$0xff]
        %v660 = vld [vmem:[#allocation9 + $0x8] sm:$0xff]
        %v661 = vld [vmem:[#allocation9 + $0x10] sm:$0xff]
        %v662 = vld [vmem:[#allocation9 + $0x18] sm:$0xff]
        %v663 = vld [vmem:[#allocation9 + $0x20] sm:$0xff]
        %v664 = vld [vmem:[#allocation9 + $0x28] sm:$0xff]
        %v665 = vld [vmem:[#allocation9 + $0x30] sm:$0xff]
        %v666 = vld [vmem:[#allocation9 + $0x38] sm:$0xff]
        %v667 = vld [vmem:[#allocation9 + $0x40] sm:$0xff]
        %v668 = vld [vmem:[#allocation9 + $0x48] sm:$0xff]
        %v669 = vld [vmem:[#allocation9 + $0x50] sm:$0xff]
        %v670 = vld [vmem:[#allocation9 + $0x58] sm:$0xff]
        %v671 = vld [vmem:[#allocation9 + $0x60] sm:$0xff]
        %v672 = vld [vmem:[#allocation9 + $0x68] sm:$0xff]
        %v673 = vld [vmem:[#allocation9 + $0x70] sm:$0xff]
        %v674 = vld [vmem:[#allocation9 + $0x78] sm:$0xff]
        %v675 = vld [vmem:[%s8] sm:$0x1]
        %v677 = vperm.slane %v675, 0
        %679 = vmatpush.msra.mxu0 %v674
        %680 = vmatpush.msra.mxu0 %v673
        %681 = vmatpush.msra.mxu0 %v672
        %682 = vmatpush.msra.mxu0 %v671
        %683 = vmatpush.msra.mxu0 %v670
        %684 = vmatpush.msra.mxu0 %v669
        %685 = vmatpush.msra.mxu0 %v668
        %686 = vmatpush.msra.mxu0 %v667
        %687 = vmatpush.msra.mxu0 %v666
        %688 = vmatpush.msra.mxu0 %v665
        %689 = vmatpush.msra.mxu0 %v664
        %690 = vmatpush.msra.mxu0 %v663
        %691 = vmatpush.msra.mxu0 %v662
        %692 = vmatpush.msra.mxu0 %v661
        %693 = vmatpush.msra.mxu0 %v660
        %694 = vmatpush.msra.mxu0 %v659
        %695 = vmatmul.f32.gmra.mxu0 %v657
        %v696 = vpop.f32.mrf.mxu0
        %v697 = vadd.f32 %v677, %v696
        %698 = vmatmul.f32.gmra.mxu0 %v658
        %v699 = vpop.f32.mrf.mxu0
        %v700 = vadd.f32 %v677, %v699
        %701 = vdwg.mxu0
        %702 = vst [vmem:[%s393] sm:$0xff] %v697
        %703 = vst [vmem:[%s393 + $0x8] sm:$0xff] %v700
        %s704 = sand.u32 %s228, 1
        %s705 = scalar_lea.sflag [#allocation5], %s704
        %s706 = sand.u32 %s228, 1
        %s707 = smul.addr %s706, 16
        %s708 = scalar_lea.vmem [#allocation11], %s707
        // Predicated region
        $region73: #{fused_mlp_forward.1} parent=55 // pred_check
          %p709 = pneg %p238
        $region74: #{fused_mlp_forward.1} parent=55 // pred_check_branch
          %711 = sbr.rel (%p709) target = $region76
        $region75: #{fused_mlp_forward.1} parent=55 // pred_region
          %s712 = smul.u32 2, %s26
          %714 = vsyncadd %s705, 0
          %s715 = smul.addr %s712, 8
          %s716 = scalar_lea.hbm %s9, %s715
          %s717 = sshll.u32 %s708, 4
          %s718 = int_to_ptr.vmem [resolvable:$true] %s717
          %s719 = sshll.u32 %s716, 4
          %s720 = int_to_ptr.hbm [resolvable:$true] %s719
          %725 = dma.vmem_to_hbm [thread:$0]  %s718, 256, %s720, %s705, 128, 128, 8
        $region76: #{fused_mlp_forward.1} parent=55 // pred_fallthru
          _
      $region56: #{fused_mlp_forward.1} parent=5 // pred_fallthru
        _
      %p726 = scmp.le.s32.totalorder 2, %s21
      // Predicated region
      $region77: #{fused_mlp_forward.1} parent=5 // pred_check
        %p727 = pneg %p726
      $region78: #{fused_mlp_forward.1} parent=5 // pred_check_branch
        %729 = sbr.rel (%p727) target = $region80
      $region79: #{fused_mlp_forward.1} parent=5 // pred_region
        %s730 = ssub.s32 %s21, 2
        // Predicated region
        $region81: #{fused_mlp_forward.1} parent=79 // pred_check
          %p731 = pneg %p244
        $region82: #{fused_mlp_forward.1} parent=79 // pred_check_branch
          %733 = sbr.rel (%p731) target = $region84
        $region83: #{fused_mlp_forward.1} parent=79 // pred_region
          %s734 = sand.u32 %s229, 1
          %s735 = scalar_lea.sflag [#allocation5], %s734
          %s736 = sand.u32 %s229, 1
          %s737 = smul.addr %s736, 16
          %s738 = scalar_lea.vmem [#allocation11], %s737
          %740 = dma.done %s735, 256
        $region84: #{fused_mlp_forward.1} parent=79 // pred_fallthru
          _
      $region80: #{fused_mlp_forward.1} parent=5 // pred_fallthru
        _
    $region6: #{fused_mlp_forward.1} parent=1 // loop_footer
      %s25 = sadd.s32 1, %s21
    $region7: #{fused_mlp_forward.1} parent=1 // loop_footer_branch
      %20 = sbr.rel target = $region3
    $region8: #{fused_mlp_forward.1} parent=1 // loop_exit
      _
    %741 = vsyncpa [#allocation4], 1
    %s742 = scalar_lea.sflag [#allocation4], 1
    %743 = vsyncpa %s742, 1
    %744 = vsyncpa [#allocation7], 1
    %745 = vsyncpa [#allocation10], 1
    %746 = vsyncpa [#allocation5], 1
    %s747 = scalar_lea.sflag [#allocation5], 1
    %748 = vsyncpa %s747, 1

</llo_original>
